<compile_context>
chip_gen: v6e
topology: v6e:2x2x1
jax: 0.10.0
libtpu: 0.0.40
codegen_flags: <defaults>
</compile_context>

<pallas_src>
import jax
import jax.numpy as jnp
import numpy as np
from jax.experimental import pallas as pl
from jax.experimental.pallas import tpu as pltpu


def screen_to_3d_kernel(coef_ref, xy_ref, out_ref):
    # coef_ref: SMEM (9,)  = [d0, d1, d2, x0, x1, x2, y0, y1, y2]
    # xy_ref:   VMEM (row_block, lane)  lanes alternate Y, X, Y, X, ...
    # out_ref:  VMEM (row_block, lane)  lanes alternate x_world, y_world, ...
    v = xy_ref[...]
    L = v.shape[-1]

    lane_idx = jax.lax.broadcasted_iota(jnp.int32, v.shape, 1)
    is_y = (lane_idx & 1) == 0            # even lanes hold Y (and get x_world)

    # Partner value inside each (Y, X) lane pair: lane j <-> lane j ^ 1.
    # pltpu.roll follows jnp.roll semantics; the wrapped lanes (0 and L-1) are
    # never selected from the wrapped direction, so row wrap-around is benign.
    nxt = pltpu.roll(v, L - 1, 1)         # nxt[j] = v[(j + 1) % L]
    prv = pltpu.roll(v, 1, 1)             # prv[j] = v[(j - 1) % L]
    partner = jnp.where(is_y, nxt, prv)

    Y = jnp.where(is_y, v, partner)       # per-lane, duplicated across the pair
    X = jnp.where(is_y, partner, v)

    d0 = coef_ref[0]; d1 = coef_ref[1]; d2 = coef_ref[2]
    x0 = coef_ref[3]; x1 = coef_ref[4]; x2 = coef_ref[5]
    y0 = coef_ref[6]; y1 = coef_ref[7]; y2 = coef_ref[8]

    # Exact reciprocal: the kernel is HBM-bandwidth-bound, the divide is free.
    inv = 1.0 / (d0 + Y * d1 + X * d2)
    xw = (x0 + Y * x1 + X * x2) * inv
    yw = -(y0 + Y * y1 + X * y2) * inv

    # NOTE: could cast to bf16 here to halve store traffic if downstream
    # tolerates it; kept f32 to preserve the module's semantics.
    out_ref[...] = jnp.where(is_y, xw, yw)


def _round_up(x, m):
    return (x + m - 1) // m * m


def _fold_coefficients(cam, zero_elevation):
    """Fold camera rows 0,1,3 and z into 9 per-plane coefficients (+ scalar z)."""
    cam = jnp.asarray(cam, jnp.float32)
    z = jnp.asarray(zero_elevation, jnp.float32).reshape(())
    a, b, c, d = cam[0, 0], cam[0, 1], cam[0, 2], cam[0, 3]
    e, f, g, h = cam[1, 0], cam[1, 1], cam[1, 2], cam[1, 3]
    m, n, o, p = cam[3, 0], cam[3, 1], cam[3, 2], cam[3, 3]
    coef = jnp.stack([
        a * f - b * e,                        # d0
        a * n - b * m,                        # d1
        e * n - f * m,                        # d2
        b * h - d * f + (b * g - c * f) * z,  # x0
        b * p - d * n + (b * o - c * n) * z,  # x1
        f * p - h * n + (f * o - g * n) * z,  # x2
        a * h - d * e + (a * g - c * e) * z,  # y0
        a * p - d * m + (a * o - c * m) * z,  # y1
        e * p - h * m + (e * o - g * m) * z,  # y2
    ])
    return coef, z


def _choose_layout(n_elems, lane_pref, rows_per_block_pref):
    """Pick (lane, row_block, rows_pad); zero padding whenever possible."""
    lane_pref = max(128, (min(lane_pref, _round_up(n_elems, 128)) // 128) * 128)
    lane = lane_pref
    c = lane_pref
    while c >= 128:                       # largest lane width dividing n_elems
        if n_elems % c == 0:
            lane = c
            break
        c -= 128
    rows = -(-n_elems // lane)
    rb_pref = max(8, (rows_per_block_pref // 8) * 8)
    rb = None
    if rows % 8 == 0:                     # largest row block dividing rows
        c = (min(rb_pref, rows) // 8) * 8
        while c >= 8:
            if rows % c == 0:
                rb = c
                break
            c -= 8
    if rb is None:
        rb = min(rb_pref, _round_up(rows, 8))
    rows_pad = _round_up(rows, rb)
    return lane, rb, rows_pad


def screen_to_3d_xy(xy, cam, zero_elevation, *, lane=512, rows_per_block=512):
    """xy: [B, S, 2] with last dim (Y, X), as in the PyTorch module.

    Returns ([B, S, 2] world (x, y), scalar z).  This is the preferred API:
    it never materializes the constant-z plane and its output reshapes
    zero-copy from the kernel's interleaved layout."""
    B, S, two = xy.shape
    assert two == 2
    coef, z = _fold_coefficients(cam, zero_elevation)

    flat = xy.astype(jnp.float32).reshape(-1)   # zero-copy: Y,X,Y,X,... pairs
    M = flat.shape[0]                           # = 2 * B * S (always even)
    lane, rb, rows_pad = _choose_layout(M, lane, rows_per_block)
    n_pad = rows_pad * lane

    if n_pad != M:
        # Padded tail points are (Y, X) = (0, 0); they only see the d0 term and
        # are sliced away below (a degenerate camera's inf/NaN there is unused).
        flat = jnp.pad(flat, (0, n_pad - M))
    tiles = flat.reshape(rows_pad, lane)        # zero-copy

    out = pl.pallas_call(
        screen_to_3d_kernel,
        out_shape=jax.ShapeDtypeStruct((rows_pad, lane), jnp.float32),
        grid_spec=pltpu.PrefetchScalarGridSpec(
            num_scalar_prefetch=0,
            grid=(rows_pad // rb,),
            in_specs=[
                pl.BlockSpec(memory_space=pltpu.MemorySpace.SMEM),
                pl.BlockSpec((rb, lane), lambda i: (i, 0)),
            ],
            out_specs=pl.BlockSpec((rb, lane), lambda i: (i, 0)),
        ),
        compiler_params=pltpu.CompilerParams(
            dimension_semantics=("parallel",)),
    )(coef, tiles)

    out = out.reshape(-1)
    if n_pad != M:
        out = out[:M]
    return out.reshape(B, S, 2), z


def screen_to_3d(xy, cam, zero_elevation, **tiling):
    """PyTorch-compatible layout [B, S, 3] = (x_world, y_world, z).

    Consumers that can take (xy_world, z) separately should call
    screen_to_3d_xy directly and skip materializing the constant-z plane."""
    xyw, z = screen_to_3d_xy(xy, cam, zero_elevation, **tiling)
    B, S, _ = xyw.shape
    zp = jnp.broadcast_to(z.astype(jnp.float32), (B, S, 1))
    return jnp.concatenate([xyw, zp], axis=-1)


def _reference(xy, cam, z):
    # pure-numpy reference mirroring the PyTorch forward
    a, b, c, d = cam[0]
    e, f, g, h = cam[1]
    m, n, o, p = cam[3]
    X = xy[:, :, 1]
    Y = xy[:, :, 0]
    zz = np.broadcast_to(z, X.shape)
    den = a * f - b * e + Y * a * n - Y * b * m + X * e * n - X * f * m
    x = (b * h - d * f + Y * b * p - Y * d * n + X * f * p - X * h * n
         + b * g * zz - c * f * zz + Y * b * o * zz - Y * c * n * zz
         + X * f * o * zz - X * g * n * zz) / den
    y = -(a * h - d * e + Y * a * p - Y * d * m + X * e * p - X * h * m
          + a * g * zz - c * e * zz + Y * a * o * zz - Y * c * m * zz
          + X * e * o * zz - X * g * m * zz) / den
    return np.stack((x, y, zz), axis=2)


if __name__ == "__main__":
    # deterministic parameter init (camera view matrix + zero elevation)
    rng = np.random.RandomState(0)
    cam_np = (np.eye(4) + 0.1 * rng.randn(4, 4)).astype(np.float32)
    zero_elev_np = np.float32(0.5)

    # Small PyTorch-layout check (exercises the padded path, grid = 1).
    B, S = 2, 8
    xy = jax.random.uniform(jax.random.PRNGKey(0), (B, S, 2), dtype=jnp.float32)
    out = jax.block_until_ready(screen_to_3d(xy, cam_np, zero_elev_np))
    ref = _reference(np.asarray(xy, np.float64), cam_np.astype(np.float64),
                     float(zero_elev_np))
    assert out.shape == (B, S, 3)
    np.testing.assert_allclose(np.asarray(out), ref, rtol=1e-4, atol=1e-5)

    # Larger check: multi-step "parallel" grid, zero padding, planes-style API.
    B2, S2 = 2, 4096
    xy2 = jax.random.uniform(jax.random.PRNGKey(1), (B2, S2, 2), dtype=jnp.float32)
    xyw2, z2 = screen_to_3d_xy(xy2, cam_np, zero_elev_np,
                               lane=128, rows_per_block=8)
    xyw2 = jax.block_until_ready(xyw2)
    ref2 = _reference(np.asarray(xy2, np.float64), cam_np.astype(np.float64),
                      float(zero_elev_np))
    np.testing.assert_allclose(np.asarray(xyw2), ref2[:, :, :2],
                               rtol=1e-4, atol=1e-5)
    np.testing.assert_allclose(float(z2), float(zero_elev_np), rtol=0, atol=0)

    print("KERNEL_OK")
</pallas_src>

<mosaic_0001>
module attributes {stable_mosaic.version = 11 : i64} {
  func.func @screen_to_3d_kernel(%arg0: i32, %arg1: memref<9xf32, #tpu.memory_space<smem>>, %arg2: memref<8x128xf32, #tpu.memory_space<vmem>>, %arg3: memref<8x128xf32, #tpu.memory_space<vmem>>) attributes {dimension_semantics = [#tpu.dimension_semantics<parallel>], iteration_bounds = array<i64: 1>, scalar_prefetch = 0 : i64, scratch_operands = 0 : i64, tpu.core_type = #tpu.core_type<tc>, window_params = [{transform_indices = @transform_0, window_bounds = array<i64: 9>}, {transform_indices = @transform_1, window_bounds = array<i64: 8, 128>}, {transform_indices = @transform_2, window_bounds = array<i64: 8, 128>}]} {
    %c0 = arith.constant 0 : index
    %c0_0 = arith.constant 0 : index
    %0 = vector.load %arg2[%c0, %c0_0] : memref<8x128xf32, #tpu.memory_space<vmem>>, vector<8x128xf32>
    %1 = tpu.iota {dimensions = array<i32: 1>} : vector<8x128xi32>
    %c1_i32 = arith.constant 1 : i32
    %2 = vector.broadcast %c1_i32 : i32 to vector<8x128xi32>
    %3 = arith.andi %1, %2 : vector<8x128xi32>
    %c0_i32 = arith.constant 0 : i32
    %4 = vector.broadcast %c0_i32 : i32 to vector<8x128xi32>
    %5 = arith.cmpi eq, %3, %4 : vector<8x128xi32>
    %c127_i32 = arith.constant 127 : i32
    %6 = tpu.dynamic_rotate %0 by %c127_i32 dim 1 : vector<8x128xf32>, i32 -> vector<8x128xf32>
    %c1_i32_1 = arith.constant 1 : i32
    %7 = tpu.dynamic_rotate %0 by %c1_i32_1 dim 1 : vector<8x128xf32>, i32 -> vector<8x128xf32>
    %8 = arith.select %5, %6, %7 : vector<8x128xi1>, vector<8x128xf32>
    %9 = arith.select %5, %0, %8 : vector<8x128xi1>, vector<8x128xf32>
    %10 = arith.select %5, %8, %0 : vector<8x128xi1>, vector<8x128xf32>
    %c0_2 = arith.constant 0 : index
    %11 = memref.load %arg1[%c0_2] : memref<9xf32, #tpu.memory_space<smem>>
    %c1 = arith.constant 1 : index
    %12 = memref.load %arg1[%c1] : memref<9xf32, #tpu.memory_space<smem>>
    %c2 = arith.constant 2 : index
    %13 = memref.load %arg1[%c2] : memref<9xf32, #tpu.memory_space<smem>>
    %c3 = arith.constant 3 : index
    %14 = memref.load %arg1[%c3] : memref<9xf32, #tpu.memory_space<smem>>
    %c4 = arith.constant 4 : index
    %15 = memref.load %arg1[%c4] : memref<9xf32, #tpu.memory_space<smem>>
    %c5 = arith.constant 5 : index
    %16 = memref.load %arg1[%c5] : memref<9xf32, #tpu.memory_space<smem>>
    %c6 = arith.constant 6 : index
    %17 = memref.load %arg1[%c6] : memref<9xf32, #tpu.memory_space<smem>>
    %c7 = arith.constant 7 : index
    %18 = memref.load %arg1[%c7] : memref<9xf32, #tpu.memory_space<smem>>
    %c8 = arith.constant 8 : index
    %19 = memref.load %arg1[%c8] : memref<9xf32, #tpu.memory_space<smem>>
    %20 = vector.broadcast %12 : f32 to vector<8x128xf32>
    %21 = arith.mulf %9, %20 : vector<8x128xf32>
    %22 = vector.broadcast %11 : f32 to vector<8x128xf32>
    %23 = arith.addf %22, %21 : vector<8x128xf32>
    %24 = vector.broadcast %13 : f32 to vector<8x128xf32>
    %25 = arith.mulf %10, %24 : vector<8x128xf32>
    %26 = arith.addf %23, %25 : vector<8x128xf32>
    %cst = arith.constant 1.000000e+00 : f32
    %27 = vector.broadcast %cst : f32 to vector<8x128xf32>
    %28 = arith.divf %27, %26 : vector<8x128xf32>
    %29 = vector.broadcast %15 : f32 to vector<8x128xf32>
    %30 = arith.mulf %9, %29 : vector<8x128xf32>
    %31 = vector.broadcast %14 : f32 to vector<8x128xf32>
    %32 = arith.addf %31, %30 : vector<8x128xf32>
    %33 = vector.broadcast %16 : f32 to vector<8x128xf32>
    %34 = arith.mulf %10, %33 : vector<8x128xf32>
    %35 = arith.addf %32, %34 : vector<8x128xf32>
    %36 = arith.mulf %35, %28 : vector<8x128xf32>
    %37 = vector.broadcast %18 : f32 to vector<8x128xf32>
    %38 = arith.mulf %9, %37 : vector<8x128xf32>
    %39 = vector.broadcast %17 : f32 to vector<8x128xf32>
    %40 = arith.addf %39, %38 : vector<8x128xf32>
    %41 = vector.broadcast %19 : f32 to vector<8x128xf32>
    %42 = arith.mulf %10, %41 : vector<8x128xf32>
    %43 = arith.addf %40, %42 : vector<8x128xf32>
    %cst_3 = arith.constant 0.000000e+00 : f32
    %44 = vector.broadcast %cst_3 : f32 to vector<8x128xf32>
    %45 = arith.subf %44, %43 : vector<8x128xf32>
    %46 = arith.mulf %45, %28 : vector<8x128xf32>
    %47 = arith.select %5, %36, %46 : vector<8x128xi1>, vector<8x128xf32>
    %c0_4 = arith.constant 0 : index
    %c0_5 = arith.constant 0 : index
    %48 = vector.load %arg3[%c0_4, %c0_5] : memref<8x128xf32, #tpu.memory_space<vmem>>, vector<8x128xf32>
    tpu.vector_store %arg3[%c0_4, %c0_5], %47 {strides = array<i32>} : memref<8x128xf32, #tpu.memory_space<vmem>>, vector<8x128xf32>,
    return
  }
  func.func @transform_0(%arg0: i32) -> i32 {
    %c0_i32 = arith.constant 0 : i32
    %c0_i32_0 = arith.constant 0 : i32
    return %c0_i32 : i32
  }
  func.func @transform_1(%arg0: i32) -> (i32, i32) {
    %c0_i32 = arith.constant 0 : i32
    %c0_i32_0 = arith.constant 0 : i32
    return %arg0, %c0_i32 : i32, i32
  }
  func.func @transform_2(%arg0: i32) -> (i32, i32) {
    %c0_i32 = arith.constant 0 : i32
    %c0_i32_0 = arith.constant 0 : i32
    return %arg0, %c0_i32 : i32, i32
  }
}

</mosaic_0001>

<llo_original>
// kernel: tpu_custom_call.1
$region0: #{tpu_custom_call.1}
  #allocation0 [shape = 'u32[]', space=smem, size = 0x4, offset = 0x4, fixed_abs, tag = 'smem constant byte address 0x4 - core index']
  #allocation1 [shape = 'u32[144,128]{1,0:T(1,128)}', space=vmem, size = 0x12000, scoped, tag = 'internal scratch']
  %s0 = inlined_call_operand.hbm [shape: f32[9], index: 0, kind: input, shape index: {}]
  %s1 = inlined_call_operand.hbm [shape: f32[8,128], index: 1, kind: input, shape index: {}]
  %s2 = inlined_call_operand.hbm [shape: f32[8,128], index: 2, kind: output, shape index: {}]
  %s3 = sld [smem:[#allocation0]]
  $region26: #{tpu_custom_call.1} parent=0
    _
  %s5 = ssub.s32 1, %s3
  %s6 = scalar_select 0, %s5, %s3
  $region1: #{tpu_custom_call.1} parent=0
    #allocation2 [shape = 'u8[512]{0}', space=smem, size = 0x200, scoped, tag = 'input window, operand 0, single buffered']
    #allocation3 [shape = 's32[1]{0}', space=sflag, size = 0x4, scoped, tag = 'scoped memory for tpu_custom_call.1']
    #allocation4 [shape = 's32[1]{0}', space=sflag, size = 0x4, scoped, tag = 'scoped memory for tpu_custom_call.1']
    #allocation5 [shape = 's32[1]{0}', space=sflag, size = 0x4, scoped, tag = 'scoped memory for tpu_custom_call.1']
    #allocation6 [shape = 'u8[4096]{0}', space=vmem, size = 0x1000, scoped, tag = 'input window, operand 1, single buffered']
    #allocation7 [shape = 'u8[4096]{0}', space=vmem, size = 0x1000, scoped, tag = 'output window, operand 0, single buffered']
    %7 = vsyncpa [#allocation5], 0
    %8 = vsyncpa [#allocation3], 0
    %9 = vsyncpa [#allocation4], 0
    // Predicated region
    $region2: #{tpu_custom_call.1} parent=1 // pred_check
      _
    $region3: #{tpu_custom_call.1} parent=1 // pred_check_branch
      %11 = sbr.rel (0) target = $region5
    $region4: #{tpu_custom_call.1} parent=1 // pred_region
      %s13 = ssub.s32 16, 16
      %14 = vsyncadd [#allocation5], %s13
      %17 = dma.hbm_to_smem %s0, 16, [#allocation2], [#allocation5]
    $region5: #{tpu_custom_call.1} parent=1 // pred_fallthru
      _
    // Predicated region
    $region6: #{tpu_custom_call.1} parent=1 // pred_check
      _
    $region7: #{tpu_custom_call.1} parent=1 // pred_check_branch
      %19 = sbr.rel (0) target = $region9
    $region8: #{tpu_custom_call.1} parent=1 // pred_region
      %s21 = ssub.s32 128, 128
      %22 = vsyncadd [#allocation3], %s21
      %s24 = sshll.u32 [#allocation6], 4
      %s25 = int_to_ptr.vmem [resolvable:$true] %s24
      %27 = dma.hbm_to_vmem [thread:$0]  %s1, 128, %s25, [#allocation3]
    $region9: #{tpu_custom_call.1} parent=1 // pred_fallthru
      _
    // Predicated region
    $region10: #{tpu_custom_call.1} parent=1 // pred_check
      _
    $region11: #{tpu_custom_call.1} parent=1 // pred_check_branch
      %29 = sbr.rel (0) target = $region13
    $region12: #{tpu_custom_call.1} parent=1 // pred_region
      %30 = dma.done [#allocation5], 16
    $region13: #{tpu_custom_call.1} parent=1 // pred_fallthru
      _
    // Predicated region
    $region14: #{tpu_custom_call.1} parent=1 // pred_check
      _
    $region15: #{tpu_custom_call.1} parent=1 // pred_check_branch
      %32 = sbr.rel (0) target = $region17
    $region16: #{tpu_custom_call.1} parent=1 // pred_region
      %33 = dma.done [#allocation3], 128
    $region17: #{tpu_custom_call.1} parent=1 // pred_fallthru
      _
    %34 = sfence
    %v35 = vld [vmem:[#allocation6] sm:$0xff]
    %v36 = vlaneseq
    %v37 = vand.u32 %v36, 127
    %v38 = vand.u32 %v37, 1
    %vm39 = vcmp.eq.s32.totalorder %v38, 0
    %40 = vrot.lane.b32.xlu0 %v35, 127
    %v41 = vpop.permute.xlu0 %40
    %42 = vrot.lane.b32.xlu0 %v35, 1
    %v43 = vpop.permute.xlu0 %42
    %v44 = vsel %vm39, %v35, %v43
    %v45 = vsel %vm39, %v41, %v35
    %s46 = sld [smem:[#allocation2]]
    %s47 = sld [smem:[#allocation2 + $0x1]]
    %s48 = sld [smem:[#allocation2 + $0x2]]
    %s49 = sld [smem:[#allocation2 + $0x3]]
    %s50 = sld [smem:[#allocation2 + $0x4]]
    %s51 = sld [smem:[#allocation2 + $0x5]]
    %s52 = sld [smem:[#allocation2 + $0x6]]
    %s53 = sld [smem:[#allocation2 + $0x7]]
    %s54 = sld [smem:[#allocation2 + $0x8]]
    %v55 = vstv %s47
    %v56 = vmul.f32 %v44, %v55
    %v57 = vstv %s46
    %v58 = vadd.f32 %v57, %v56
    %v59 = vstv %s48
    %v60 = vmul.f32 %v45, %v59
    %v61 = vadd.f32 %v58, %v60
    %v62 = vrcp.pop %v61
    %v63 = vmul.f32 1.0, %v62
    %v64 = vstv %s50
    %v65 = vmul.f32 %v44, %v64
    %v66 = vstv %s49
    %v67 = vadd.f32 %v66, %v65
    %v68 = vstv %s51
    %v69 = vmul.f32 %v45, %v68
    %v70 = vadd.f32 %v67, %v69
    %v71 = vmul.f32 %v70, %v63
    %v72 = vstv %s53
    %v73 = vmul.f32 %v44, %v72
    %v74 = vstv %s52
    %v75 = vadd.f32 %v74, %v73
    %v76 = vstv %s54
    %v77 = vmul.f32 %v45, %v76
    %v78 = vadd.f32 %v75, %v77
    %v79 = vsub.f32 0.0, %v78
    %v80 = vmul.f32 %v79, %v63
    %v81 = vsel %vm39, %v71, %v80
    %82 = vst [vmem:[#allocation7] sm:$0xff] %v81
    // Predicated region
    $region18: #{tpu_custom_call.1} parent=1 // pred_check
      _
    $region19: #{tpu_custom_call.1} parent=1 // pred_check_branch
      %84 = sbr.rel (0) target = $region21
    $region20: #{tpu_custom_call.1} parent=1 // pred_region
      %s86 = ssub.s32 128, 128
      %87 = vsyncadd [#allocation4], %s86
      %s89 = sshll.u32 [#allocation7], 4
      %s90 = int_to_ptr.vmem [resolvable:$true] %s89
      %92 = dma.vmem_to_hbm [thread:$0]  %s90, 128, %s2, [#allocation4]
    $region21: #{tpu_custom_call.1} parent=1 // pred_fallthru
      _
    // Predicated region
    $region22: #{tpu_custom_call.1} parent=1 // pred_check
      _
    $region23: #{tpu_custom_call.1} parent=1 // pred_check_branch
      %94 = sbr.rel (0) target = $region25
    $region24: #{tpu_custom_call.1} parent=1 // pred_region
      %95 = dma.done [#allocation4], 128
    $region25: #{tpu_custom_call.1} parent=1 // pred_fallthru
      _
    %96 = vsyncpa [#allocation3], 1
    %97 = vsyncpa [#allocation4], 1
    %98 = vsyncpa [#allocation5], 1

</llo_original>
